<compile_context>
chip_gen: v6e
topology: v6e:2x2x1
jax: 0.10.0
libtpu: 0.0.40
codegen_flags: <defaults>
</compile_context>

<pallas_src>
import functools

import jax
import jax.numpy as jnp
from jax.experimental import pallas as pl
from jax.experimental.pallas import tpu as pltpu


def _round_up(x, m):
    return ((x + m - 1) // m) * m


def _cdiv(a, b):
    return (a + b - 1) // b


# ---------------------------------------------------------------------------
# Hardware config (queried once).
# ---------------------------------------------------------------------------
@functools.lru_cache(maxsize=1)
def _hw_config():
    kind = ""
    try:
        kind = jax.devices()[0].device_kind.lower()
    except Exception:
        pass
    is_v7 = "v7" in kind
    is_v5e = ("v5e" in kind) or ("v5 lite" in kind) or ("v5litepod" in kind)

    vmem_cap = (64 << 20) if is_v7 else (128 << 20)
    try:
        vmem_cap = int(pltpu.get_tpu_info().vmem_capacity_bytes)
    except Exception:
        pass

    if is_v7:
        # ~310 FLOPs/weight-byte knee, 64 MiB VMEM, 2 TensorCores.
        tm_pref, cores, default_scoped = 512, 2, 32 << 20
    elif is_v5e:
        # ~240 FLOPs/weight-byte knee, 16 MiB default scoped VMEM.
        tm_pref, cores, default_scoped = 384, 1, 16 << 20
    else:
        # v6e (default): ~680 FLOPs/weight-byte knee, 128 MiB VMEM.
        tm_pref, cores, default_scoped = 1024, 1, 32 << 20
    if ("v4" in kind) or ("v5p" in kind):
        cores = 2

    budget = int(vmem_cap * (0.60 if is_v7 else 0.70))
    vmem_limit_cap = min(int(vmem_cap * 0.90), 100 << 20)
    return dict(tm_pref=tm_pref, cores=cores, budget=budget,
                default_scoped=default_scoped, vmem_limit_cap=vmem_limit_cap)


# ---------------------------------------------------------------------------
# Kernels.
# ---------------------------------------------------------------------------
def ffn_kernel_resident(x_ref, w1_ref, b1_ref, w2_ref, b2_ref, o_ref):
    """Full FFN for one row tile; W1/W2 are resident (constant index_map)."""
    x = x_ref[...].astype(jnp.bfloat16)
    h = jnp.dot(x, w1_ref[...], preferred_element_type=jnp.float32)
    h = jnp.maximum(h + b1_ref[...], 0.0)
    # TODO(synk): dropout is identity in eval mode; training-mode dropout would use
    # pltpu.prng_seed / pltpu.stateful_bernoulli on `h` here.
    y = jnp.dot(h.astype(jnp.bfloat16), w2_ref[...],
                preferred_element_type=jnp.float32)
    o_ref[...] = (y + b2_ref[...]).astype(o_ref.dtype)


def ffn_kernel_split(x_ref, w1_ref, b1_ref, w2_ref, b2_ref, o_ref, acc_ref):
    """d_ff-sliced FFN with fp32 accumulator (for weights too large for VMEM)."""
    j = pl.program_id(1)

    @pl.when(j == 0)
    def _():
        acc_ref[...] = jnp.zeros_like(acc_ref)

    x = x_ref[...].astype(jnp.bfloat16)
    h = jnp.dot(x, w1_ref[...], preferred_element_type=jnp.float32)
    h = jnp.maximum(h + b1_ref[...], 0.0)
    acc_ref[...] += jnp.dot(h.astype(jnp.bfloat16), w2_ref[...],
                            preferred_element_type=jnp.float32)

    @pl.when(j == pl.num_programs(1) - 1)
    def _():
        o_ref[...] = (acc_ref[...] + b2_ref[...]).astype(o_ref.dtype)


# ---------------------------------------------------------------------------
# Parameter prep (once, at module init).
# ---------------------------------------------------------------------------
def prepare_ffn_params(w1, b1, w2, b2):
    """Transpose to (in, out) layout, pad ONLY the internal d_ff dim, cast weights
    to bf16, keep biases fp32.  d_model is left unpadded so x / out need no
    wrapper-side padding passes."""
    d_ff, d_model = w1.shape
    dff_p = _round_up(d_ff, 256) if d_ff >= 1024 else _round_up(d_ff, 128)

    w1_t = jnp.zeros((d_model, dff_p), jnp.bfloat16).at[:, :d_ff].set(
        w1.T.astype(jnp.bfloat16))
    w2_t = jnp.zeros((dff_p, d_model), jnp.bfloat16).at[:d_ff, :].set(
        w2.T.astype(jnp.bfloat16))
    b1_p = jnp.zeros((1, dff_p), jnp.float32).at[0, :d_ff].set(
        b1.astype(jnp.float32))
    b2_p = b2.astype(jnp.float32).reshape(1, d_model)
    return w1_t, b1_p, w2_t, b2_p


# ---------------------------------------------------------------------------
# VMEM estimates + tile / mode selection.
# ---------------------------------------------------------------------------
def _vmem_resident(tm, dm, dff, x_bytes, out_bytes):
    bf16, f32 = 2, 4
    return (2 * tm * dm * x_bytes          # x tile (double-buffered)
            + 2 * dm * dff * bf16          # W1 (buffer pair; fetched once)
            + 2 * dff * f32                # b1
            + 2 * dff * dm * bf16          # W2
            + 2 * dm * f32                 # b2
            + 2 * tm * dm * out_bytes      # out tile
            + tm * dff * (f32 + bf16)      # h (f32) + bf16 cast of h
            + tm * dm * bf16)              # bf16 cast of x


def _vmem_split(tm, dm, tf, x_bytes, out_bytes):
    bf16, f32 = 2, 4
    return (2 * tm * dm * x_bytes
            + 2 * dm * tf * bf16
            + 2 * tf * f32
            + 2 * tf * dm * bf16
            + 2 * dm * f32
            + 2 * tm * dm * out_bytes
            + tm * dm * f32                # fp32 accumulator scratch
            + tm * tf * (f32 + bf16)
            + tm * dm * bf16)


def _tm_candidates(tm0):
    cands, t = [], tm0
    while t >= 64:
        cands.append(t)
        t = _round_up(t // 2, 8)
    return cands or [tm0]


def _choose_config(M, d_model, dff_p, x_bytes, out_bytes):
    hw = _hw_config()
    budget = hw["budget"]

    # Balanced row tiles: generation-preferred size, megacore needs >= 2 tiles,
    # and tm sized so zero-row padding is minimal.
    n_tiles = max(1, _cdiv(M, hw["tm_pref"]))
    if hw["cores"] >= 2 and M >= 256:
        n_tiles = max(n_tiles, hw["cores"])
    tm0 = max(8, _round_up(_cdiv(M, n_tiles), 8))

    # 1) Weights-resident fast path: stream W1/W2 from HBM exactly once.
    w_resident_bytes = 2 * (d_model * dff_p + dff_p * d_model) * 2
    if w_resident_bytes <= int(budget * 0.8):
        for tm in _tm_candidates(tm0):
            est = _vmem_resident(tm, d_model, dff_p, x_bytes, out_bytes)
            if est <= budget:
                return "resident", tm, dff_p, est

    # 2) d_ff-split fallback (weights re-streamed once per row tile).
    for tm in _tm_candidates(tm0):
        for tf in (512, 256, 128):
            if dff_p % tf == 0:
                est = _vmem_split(tm, d_model, tf, x_bytes, out_bytes)
                if est <= budget:
                    return "split", tm, tf, est

    # Last resort: smallest tiles even if the estimate exceeds the soft budget.
    tm = min(64, tm0)
    tf = 128 if dff_p % 128 == 0 else dff_p
    return "split", tm, tf, _vmem_split(tm, d_model, tf, x_bytes, out_bytes)


# ---------------------------------------------------------------------------
# Forward.
# ---------------------------------------------------------------------------
@functools.partial(jax.jit, static_argnames=("mode", "tm", "tf", "vmem_limit"))
def _ffn_call(x, w1_t, b1_p, w2_t, b2_p, *, mode, tm, tf, vmem_limit):
    lead_shape = x.shape[:-1]
    d_model = x.shape[-1]
    dff_p = w1_t.shape[1]
    M = 1
    for s in lead_shape:
        M *= s
    n_row_tiles = _cdiv(M, tm)
    M_pad = n_row_tiles * tm

    x2d = x.reshape(M, d_model)
    if M_pad != M:
        # Single fused pad+cast pass (rows only; d_model stays unpadded).
        x2d = jnp.zeros((M_pad, d_model), jnp.bfloat16).at[:M].set(
            x2d.astype(jnp.bfloat16))
    # else: pass x in its original dtype; the kernel casts to bf16 per tile.

    cp = pltpu.CompilerParams(
        dimension_semantics=("parallel",) if mode == "resident"
        else ("parallel", "arbitrary"),
        vmem_limit_bytes=vmem_limit,
    )

    if mode == "resident":
        out2d = pl.pallas_call(
            ffn_kernel_resident,
            out_shape=jax.ShapeDtypeStruct((M_pad, d_model), x.dtype),
            grid_spec=pltpu.PrefetchScalarGridSpec(
                num_scalar_prefetch=0,
                grid=(n_row_tiles,),
                in_specs=[
                    pl.BlockSpec((tm, d_model), lambda i: (i, 0)),      # x rows
                    pl.BlockSpec((d_model, dff_p), lambda i: (0, 0)),   # W1^T (resident)
                    pl.BlockSpec((1, dff_p), lambda i: (0, 0)),         # b1
                    pl.BlockSpec((dff_p, d_model), lambda i: (0, 0)),   # W2^T (resident)
                    pl.BlockSpec((1, d_model), lambda i: (0, 0)),       # b2
                ],
                out_specs=pl.BlockSpec((tm, d_model), lambda i: (i, 0)),
            ),
            compiler_params=cp,
        )(x2d, w1_t, b1_p, w2_t, b2_p)
    else:
        # NOTE: for fp32 outputs the accumulator could live in o_ref directly
        # (minor VMEM saving); kept as a scratch for dtype generality.
        out2d = pl.pallas_call(
            ffn_kernel_split,
            out_shape=jax.ShapeDtypeStruct((M_pad, d_model), x.dtype),
            grid_spec=pltpu.PrefetchScalarGridSpec(
                num_scalar_prefetch=0,
                grid=(n_row_tiles, dff_p // tf),
                in_specs=[
                    pl.BlockSpec((tm, d_model), lambda i, j: (i, 0)),   # x rows
                    pl.BlockSpec((d_model, tf), lambda i, j: (0, j)),   # W1^T slice
                    pl.BlockSpec((1, tf), lambda i, j: (0, j)),         # b1 slice
                    pl.BlockSpec((tf, d_model), lambda i, j: (j, 0)),   # W2^T slice
                    pl.BlockSpec((1, d_model), lambda i, j: (0, 0)),    # b2
                ],
                out_specs=pl.BlockSpec((tm, d_model), lambda i, j: (i, 0)),
                scratch_shapes=[pltpu.VMEM((tm, d_model), jnp.float32)],
            ),
            compiler_params=cp,
        )(x2d, w1_t, b1_p, w2_t, b2_p)

    if M_pad != M:
        out2d = out2d[:M]
    return out2d.reshape(*lead_shape, d_model)


def ffn_forward(x, w1_t, b1_p, w2_t, b2_p):
    """x: (..., d_model); params from prepare_ffn_params."""
    d_model = x.shape[-1]
    dff_p = w1_t.shape[1]
    M = 1
    for s in x.shape[:-1]:
        M *= s

    mode, tm, tf, est = _choose_config(
        M, d_model, dff_p,
        x_bytes=jnp.dtype(x.dtype).itemsize,
        out_bytes=jnp.dtype(x.dtype).itemsize)

    hw = _hw_config()
    vmem_limit = None
    if est > hw["default_scoped"]:
        vmem_limit = int(min(max(int(est * 1.3), est + (4 << 20)),
                             hw["vmem_limit_cap"]))

    return _ffn_call(x, w1_t, b1_p, w2_t, b2_p,
                     mode=mode, tm=tm, tf=tf, vmem_limit=vmem_limit)


# ---------------------------------------------------------------------------
# References.
# ---------------------------------------------------------------------------
def ffn_reference_bf16(x, w1, b1, w2, b2):
    # Matches kernel numerics: bf16 operands, fp32 accumulation, fp32 epilogue.
    xb = x.astype(jnp.bfloat16)
    h = jnp.einsum("bsd,fd->bsf", xb, w1.astype(jnp.bfloat16),
                   preferred_element_type=jnp.float32) + b1
    h = jnp.maximum(h, 0.0)
    return jnp.einsum("bsf,df->bsd", h.astype(jnp.bfloat16),
                      w2.astype(jnp.bfloat16),
                      preferred_element_type=jnp.float32) + b2


def ffn_reference_fp32(x, w1, b1, w2, b2):
    h = jnp.maximum(jnp.einsum("bsd,fd->bsf", x, w1) + b1, 0.0)
    return jnp.einsum("bsf,df->bsd", h, w2) + b2


if __name__ == "__main__":
    # Small shapes consistent with the module's forward.
    batch, seq, d_model, d_ff = 2, 8, 32, 64

    key = jax.random.PRNGKey(0)
    kx, kw1, kb1, kw2, kb2 = jax.random.split(key, 5)

    x = jax.random.normal(kx, (batch, seq, d_model), dtype=jnp.float32)

    # nn.Linear-style uniform(-1/sqrt(fan_in), 1/sqrt(fan_in)) init.
    bound1 = 1.0 / (d_model ** 0.5)
    w1 = jax.random.uniform(kw1, (d_ff, d_model), minval=-bound1, maxval=bound1)
    b1 = jax.random.uniform(kb1, (d_ff,), minval=-bound1, maxval=bound1)
    bound2 = 1.0 / (d_ff ** 0.5)
    w2 = jax.random.uniform(kw2, (d_model, d_ff), minval=-bound2, maxval=bound2)
    b2 = jax.random.uniform(kb2, (d_model,), minval=-bound2, maxval=bound2)

    # Parameter prep happens once (like module __init__), not per call.
    params = prepare_ffn_params(w1, b1, w2, b2)

    out = ffn_forward(x, *params)
    jax.block_until_ready(out)

    assert out.shape == (batch, seq, d_model)
    ref_bf16 = ffn_reference_bf16(x, w1, b1, w2, b2)
    assert jnp.allclose(out, ref_bf16, atol=2e-2, rtol=2e-2), "mismatch vs bf16 ref"
    ref_fp32 = ffn_reference_fp32(x, w1, b1, w2, b2)
    assert jnp.allclose(out, ref_fp32, atol=5e-2, rtol=5e-2), "mismatch vs fp32 ref"

    print("KERNEL_OK")
</pallas_src>

<mosaic_0001>
module attributes {stable_mosaic.version = 11 : i64} {
  func.func @ffn_kernel_resident(%arg0: i32, %arg1: memref<16x32xf32, #tpu.memory_space<vmem>>, %arg2: memref<32x128xbf16, #tpu.memory_space<vmem>>, %arg3: memref<1x128xf32, #tpu.memory_space<vmem>>, %arg4: memref<128x32xbf16, #tpu.memory_space<vmem>>, %arg5: memref<1x32xf32, #tpu.memory_space<vmem>>, %arg6: memref<16x32xf32, #tpu.memory_space<vmem>>) attributes {dimension_semantics = [#tpu.dimension_semantics<parallel>], iteration_bounds = array<i64: 1>, scalar_prefetch = 0 : i64, scratch_operands = 0 : i64, tpu.core_type = #tpu.core_type<tc>, window_params = [{transform_indices = @transform_0, window_bounds = array<i64: 16, 32>}, {pipeline_mode = #tpu.pipeline_mode<synchronous>, transform_indices = @transform_1, window_bounds = array<i64: 32, 128>}, {pipeline_mode = #tpu.pipeline_mode<synchronous>, transform_indices = @transform_2, window_bounds = array<i64: 1, 128>}, {pipeline_mode = #tpu.pipeline_mode<synchronous>, transform_indices = @transform_3, window_bounds = array<i64: 128, 32>}, {pipeline_mode = #tpu.pipeline_mode<synchronous>, transform_indices = @transform_4, window_bounds = array<i64: 1, 32>}, {transform_indices = @transform_5, window_bounds = array<i64: 16, 32>}]} {
    %c0 = arith.constant 0 : index
    %c0_0 = arith.constant 0 : index
    %0 = vector.load %arg1[%c0, %c0_0] : memref<16x32xf32, #tpu.memory_space<vmem>>, vector<16x32xf32>
    %1 = arith.truncf %0 : vector<16x32xf32> to vector<16x32xbf16>
    %c0_1 = arith.constant 0 : index
    %c0_2 = arith.constant 0 : index
    %2 = vector.load %arg2[%c0_1, %c0_2] : memref<32x128xbf16, #tpu.memory_space<vmem>>, vector<32x128xbf16>
    %cst = arith.constant dense<0.000000e+00> : vector<16x128xf32>
    %3 = tpu.matmul %1, %2, %cst {dimension_numbers = #tpu.dot_dimension_numbers<[1], [0], [0], [1], [0, 0, 1, 1], [], []>} : vector<16x32xbf16>, vector<32x128xbf16>, vector<16x128xf32> -> vector<16x128xf32>
    %c0_3 = arith.constant 0 : index
    %c0_4 = arith.constant 0 : index
    %4 = vector.load %arg3[%c0_3, %c0_4] : memref<1x128xf32, #tpu.memory_space<vmem>>, vector<1x128xf32>
    %5 = vector.broadcast %4 : vector<1x128xf32> to vector<16x128xf32>
    %6 = arith.addf %3, %5 : vector<16x128xf32>
    %cst_5 = arith.constant 0.000000e+00 : f32
    %7 = vector.broadcast %cst_5 : f32 to vector<16x128xf32>
    %8 = arith.maximumf %6, %7 : vector<16x128xf32>
    %9 = arith.truncf %8 : vector<16x128xf32> to vector<16x128xbf16>
    %c0_6 = arith.constant 0 : index
    %c0_7 = arith.constant 0 : index
    %10 = vector.load %arg4[%c0_6, %c0_7] : memref<128x32xbf16, #tpu.memory_space<vmem>>, vector<128x32xbf16>
    %cst_8 = arith.constant dense<0.000000e+00> : vector<16x32xf32>
    %11 = tpu.matmul %9, %10, %cst_8 {dimension_numbers = #tpu.dot_dimension_numbers<[1], [0], [0], [1], [0, 0, 1, 1], [], []>} : vector<16x128xbf16>, vector<128x32xbf16>, vector<16x32xf32> -> vector<16x32xf32>
    %c0_9 = arith.constant 0 : index
    %c0_10 = arith.constant 0 : index
    %12 = vector.load %arg5[%c0_9, %c0_10] : memref<1x32xf32, #tpu.memory_space<vmem>>, vector<1x32xf32>
    %13 = vector.broadcast %12 : vector<1x32xf32> to vector<16x32xf32>
    %14 = arith.addf %11, %13 : vector<16x32xf32>
    %c0_11 = arith.constant 0 : index
    %c0_12 = arith.constant 0 : index
    %15 = vector.load %arg6[%c0_11, %c0_12] : memref<16x32xf32, #tpu.memory_space<vmem>>, vector<16x32xf32>
    tpu.vector_store %arg6[%c0_11, %c0_12], %14 {strides = array<i32>} : memref<16x32xf32, #tpu.memory_space<vmem>>, vector<16x32xf32>,
    return
  }
  func.func @transform_0(%arg0: i32) -> (i32, i32) {
    %c0_i32 = arith.constant 0 : i32
    %c0_i32_0 = arith.constant 0 : i32
    return %arg0, %c0_i32 : i32, i32
  }
  func.func @transform_1(%arg0: i32) -> (i32, i32) {
    %c0_i32 = arith.constant 0 : i32
    %c0_i32_0 = arith.constant 0 : i32
    %c0_i32_1 = arith.constant 0 : i32
    return %c0_i32, %c0_i32_0 : i32, i32
  }
  func.func @transform_2(%arg0: i32) -> (i32, i32) {
    %c0_i32 = arith.constant 0 : i32
    %c0_i32_0 = arith.constant 0 : i32
    %c0_i32_1 = arith.constant 0 : i32
    return %c0_i32, %c0_i32_0 : i32, i32
  }
  func.func @transform_3(%arg0: i32) -> (i32, i32) {
    %c0_i32 = arith.constant 0 : i32
    %c0_i32_0 = arith.constant 0 : i32
    %c0_i32_1 = arith.constant 0 : i32
    return %c0_i32, %c0_i32_0 : i32, i32
  }
  func.func @transform_4(%arg0: i32) -> (i32, i32) {
    %c0_i32 = arith.constant 0 : i32
    %c0_i32_0 = arith.constant 0 : i32
    %c0_i32_1 = arith.constant 0 : i32
    return %c0_i32, %c0_i32_0 : i32, i32
  }
  func.func @transform_5(%arg0: i32) -> (i32, i32) {
    %c0_i32 = arith.constant 0 : i32
    %c0_i32_0 = arith.constant 0 : i32
    return %arg0, %c0_i32 : i32, i32
  }
}

</mosaic_0001>

<llo_original>
// kernel: _ffn_call.1
$region0: #{_ffn_call.1}
  #allocation0 [shape = 'u32[]', space=smem, size = 0x4, offset = 0x4, fixed_abs, tag = 'smem constant byte address 0x4 - core index']
  #allocation1 [shape = 'u32[144,128]{1,0:T(1,128)}', space=vmem, size = 0x12000, scoped, tag = 'internal scratch']
  %s0 = inlined_call_operand.vmem [shape: f32[16,32], index: 0, kind: input, shape index: {}]
  %s1 = inlined_call_operand.vmem [shape: bf16[32,128], index: 1, kind: input, shape index: {}]
  %s2 = inlined_call_operand.vmem [shape: f32[1,128], index: 2, kind: input, shape index: {}]
  %s3 = inlined_call_operand.vmem [shape: bf16[128,32], index: 3, kind: input, shape index: {}]
  %s4 = inlined_call_operand.vmem [shape: f32[1,32], index: 4, kind: input, shape index: {}]
  %s5 = inlined_call_operand.hbm [shape: f32[16,32], index: 5, kind: output, shape index: {}]
  %s6 = sld [smem:[#allocation0]]
  $region30: #{_ffn_call.1} parent=0
    _
  %s8 = ssub.s32 1, %s6
  %s9 = scalar_select 0, %s8, %s6
  $region1: #{_ffn_call.1} parent=0
    #allocation2 [shape = 'u8[8192]{0}', space=vmem, size = 0x2000, scoped, tag = 'output window, operand 0, single buffered']
    #allocation3 [shape = 's32[1]{0}', space=sflag, size = 0x4, scoped, tag = 'scoped memory for _ffn_call.1']
    %10 = vsyncpa [#allocation3], 0
    // Predicated region
    $region2: #{_ffn_call.1} parent=1 // pred_check
      _
    $region3: #{_ffn_call.1} parent=1 // pred_check_branch
      %12 = sbr.rel (0) target = $region5
    $region4: #{_ffn_call.1} parent=1 // pred_region
      _
    $region5: #{_ffn_call.1} parent=1 // pred_fallthru
      _
    // Predicated region
    $region6: #{_ffn_call.1} parent=1 // pred_check
      _
    $region7: #{_ffn_call.1} parent=1 // pred_check_branch
      %14 = sbr.rel (0) target = $region9
    $region8: #{_ffn_call.1} parent=1 // pred_region
      _
    $region9: #{_ffn_call.1} parent=1 // pred_fallthru
      _
    // Predicated region
    $region10: #{_ffn_call.1} parent=1 // pred_check
      _
    $region11: #{_ffn_call.1} parent=1 // pred_check_branch
      %16 = sbr.rel (0) target = $region13
    $region12: #{_ffn_call.1} parent=1 // pred_region
      _
    $region13: #{_ffn_call.1} parent=1 // pred_fallthru
      _
    // Predicated region
    $region14: #{_ffn_call.1} parent=1 // pred_check
      _
    $region15: #{_ffn_call.1} parent=1 // pred_check_branch
      %18 = sbr.rel (0) target = $region17
    $region16: #{_ffn_call.1} parent=1 // pred_region
      _
    $region17: #{_ffn_call.1} parent=1 // pred_fallthru
      _
    // Predicated region
    $region18: #{_ffn_call.1} parent=1 // pred_check
      _
    $region19: #{_ffn_call.1} parent=1 // pred_check_branch
      %20 = sbr.rel (0) target = $region21
    $region20: #{_ffn_call.1} parent=1 // pred_region
      _
    $region21: #{_ffn_call.1} parent=1 // pred_fallthru
      _
    %v22 = vld [vmem:[%s0] sm:$0xff]
    %v23 = vld [vmem:[%s0 + $0x8] sm:$0xff]
    %v24 = vpack.c.bf16 %v23, %v22
    %v25 = vld [vmem:[%s1] sm:$0xf]
    %v26 = vld [vmem:[%s1 + $0x4] sm:$0xf]
    %v27 = vld [vmem:[%s1 + $0x8] sm:$0xf]
    %v28 = vld [vmem:[%s1 + $0xc] sm:$0xf]
    %v29 = vld [vmem:[%s2] sm:$0x1]
    %v31 = vlaneseq
    %v32 = vshrl.u32 %v31, 7
    %v33 = vsub.s32 0, %v32
    %v34 = vrot.slane %v29, %v33
    %v40 = vunpack.c.l.b16 %v25
    %v41 = vunpack.c.l.b16 %v26
    %v42 = vunpack.c.l.b16 %v27
    %v43 = vunpack.c.l.b16 %v28
    %v44 = vpack.c.b16 %v41, %v40
    %v45 = vpack.c.b16 %v43, %v42
    %vm48 = vcmask 261120
    %v50 = vsel %vm48, %v24, 0
    %52 = vmatprep.subr.bf16.mxu0 0
    %53 = vmatpush1.bf16.msra.mxu0 0
    %54 = vmatprep.subr.bf16.mxu0 0
    %55 = vmatpush1.bf16.msra.mxu0 0
    %56 = vmatprep.subr.bf16.mxu0 0
    %57 = vmatpush1.bf16.msra.mxu0 0
    %58 = vmatprep.subr.bf16.mxu0 0
    %59 = vmatpush1.bf16.msra.mxu0 0
    %60 = vmatprep.subr.bf16.mxu0 0
    %61 = vmatpush1.bf16.msra.mxu0 0
    %62 = vmatprep.subr.bf16.mxu0 0
    %63 = vmatpush1.bf16.msra.mxu0 0
    %64 = vmatprep.subr.bf16.mxu0 0
    %65 = vmatpush1.bf16.msra.mxu0 %v45
    %66 = vmatprep.subr.bf16.mxu0 0
    %67 = vmatpush1.bf16.msra.mxu0 %v44
    %68 = vmatprep.subr.bf16.mxu0 0
    %69 = vmatpush2.bf16.msra.mxu0 0
    %70 = vmatprep.subr.bf16.mxu0 0
    %71 = vmatpush2.bf16.msra.mxu0 0
    %72 = vmatprep.subr.bf16.mxu0 0
    %73 = vmatpush2.bf16.msra.mxu0 0
    %74 = vmatprep.subr.bf16.mxu0 0
    %75 = vmatpush2.bf16.msra.mxu0 0
    %76 = vmatprep.subr.bf16.mxu0 0
    %77 = vmatpush2.bf16.msra.mxu0 0
    %78 = vmatprep.subr.bf16.mxu0 0
    %79 = vmatpush2.bf16.msra.mxu0 0
    %80 = vmatprep.subr.bf16.mxu0 0
    %81 = vmatpush2.bf16.msra.mxu0 0
    %82 = vmatprep.subr.bf16.mxu0 0
    %83 = vmatpush2.bf16.msra.mxu0 0
    %84 = vmatprep.mubr.bf16.mxu0 0
    %85 = vmatmul.mubr.bf16.gmra.mxu0 %v50
    %v86 = vpop.f32.mrf.mxu0
    %v87 = vadd.f32 %v34, %v86
    %v88 = vpop.f32.mrf.mxu0
    %v89 = vpop.f32.mrf.mxu0
    %v90 = vadd.f32 %v34, %v89
    %v91 = vpop.f32.mrf.mxu0
    %92 = vdwg.mxu0
    %v93 = vmax.f32 %v87, 0.0
    %v94 = vmax.f32 %v90, 0.0
    %v95 = vpack.c.bf16 %v94, %v93
    %v96 = vld [vmem:[%s3] sm:$0xf]
    %v97 = vld [vmem:[%s3 + $0x4] sm:$0xf]
    %v98 = vld [vmem:[%s3 + $0x8] sm:$0xf]
    %v99 = vld [vmem:[%s3 + $0xc] sm:$0xf]
    %v100 = vld [vmem:[%s3 + $0x10] sm:$0xf]
    %v101 = vld [vmem:[%s3 + $0x14] sm:$0xf]
    %v102 = vld [vmem:[%s3 + $0x18] sm:$0xf]
    %v103 = vld [vmem:[%s3 + $0x1c] sm:$0xf]
    %v104 = vld [vmem:[%s3 + $0x20] sm:$0xf]
    %v105 = vld [vmem:[%s3 + $0x24] sm:$0xf]
    %v106 = vld [vmem:[%s3 + $0x28] sm:$0xf]
    %v107 = vld [vmem:[%s3 + $0x2c] sm:$0xf]
    %v108 = vld [vmem:[%s3 + $0x30] sm:$0xf]
    %v109 = vld [vmem:[%s3 + $0x34] sm:$0xf]
    %v110 = vld [vmem:[%s3 + $0x38] sm:$0xf]
    %v111 = vld [vmem:[%s3 + $0x3c] sm:$0xf]
    %v112 = vld [vmem:[%s4] sm:$0x1]
    %v114 = vlaneseq
    %v115 = vshrl.u32 %v114, 7
    %v116 = vsub.s32 0, %v115
    %v117 = vrot.slane %v112, %v116
    %v135 = vunpack.c.l.b16 %v96
    %v136 = vunpack.c.l.b16 %v97
    %v137 = vunpack.c.l.b16 %v98
    %v138 = vunpack.c.l.b16 %v99
    %v139 = vunpack.c.l.b16 %v100
    %v140 = vunpack.c.l.b16 %v101
    %v141 = vunpack.c.l.b16 %v102
    %v142 = vunpack.c.l.b16 %v103
    %v143 = vunpack.c.l.b16 %v104
    %v144 = vunpack.c.l.b16 %v105
    %v145 = vunpack.c.l.b16 %v106
    %v146 = vunpack.c.l.b16 %v107
    %v147 = vunpack.c.l.b16 %v108
    %v148 = vunpack.c.l.b16 %v109
    %v149 = vunpack.c.l.b16 %v110
    %v150 = vunpack.c.l.b16 %v111
    %v151 = vpack.c.b16 %v136, %v135
    %v152 = vpack.c.b16 %v138, %v137
    %v153 = vpack.c.b16 %v140, %v139
    %v154 = vpack.c.b16 %v142, %v141
    %v155 = vpack.c.b16 %v144, %v143
    %v156 = vpack.c.b16 %v146, %v145
    %v157 = vpack.c.b16 %v148, %v147
    %v158 = vpack.c.b16 %v150, %v149
    %167 = vmatprep.subr.bf16.mxu0 0
    %168 = vmatpush1.bf16.msra.mxu0 %v158
    %169 = vmatprep.subr.bf16.mxu0 0
    %170 = vmatpush1.bf16.msra.mxu0 %v157
    %171 = vmatprep.subr.bf16.mxu0 0
    %172 = vmatpush1.bf16.msra.mxu0 %v156
    %173 = vmatprep.subr.bf16.mxu0 0
    %174 = vmatpush1.bf16.msra.mxu0 %v155
    %175 = vmatprep.subr.bf16.mxu0 0
    %176 = vmatpush1.bf16.msra.mxu0 %v154
    %177 = vmatprep.subr.bf16.mxu0 0
    %178 = vmatpush1.bf16.msra.mxu0 %v153
    %179 = vmatprep.subr.bf16.mxu0 0
    %180 = vmatpush1.bf16.msra.mxu0 %v152
    %181 = vmatprep.subr.bf16.mxu0 0
    %182 = vmatpush1.bf16.msra.mxu0 %v151
    %183 = vmatprep.subr.bf16.mxu0 0
    %184 = vmatpush2.bf16.msra.mxu0 0
    %185 = vmatprep.subr.bf16.mxu0 0
    %186 = vmatpush2.bf16.msra.mxu0 0
    %187 = vmatprep.subr.bf16.mxu0 0
    %188 = vmatpush2.bf16.msra.mxu0 0
    %189 = vmatprep.subr.bf16.mxu0 0
    %190 = vmatpush2.bf16.msra.mxu0 0
    %191 = vmatprep.subr.bf16.mxu0 0
    %192 = vmatpush2.bf16.msra.mxu0 0
    %193 = vmatprep.subr.bf16.mxu0 0
    %194 = vmatpush2.bf16.msra.mxu0 0
    %195 = vmatprep.subr.bf16.mxu0 0
    %196 = vmatpush2.bf16.msra.mxu0 0
    %197 = vmatprep.subr.bf16.mxu0 0
    %198 = vmatpush2.bf16.msra.mxu0 0
    %199 = vmatprep.mubr.bf16.mxu0 0
    %200 = vmatmul.mubr.bf16.gmra.mxu0 %v95
    %v201 = vpop.f32.mrf.mxu0
    %v202 = vadd.f32 %v117, %v201
    %v203 = vpop.f32.mrf.mxu0
    %v204 = vpop.f32.mrf.mxu0
    %v205 = vadd.f32 %v117, %v204
    %v206 = vpop.f32.mrf.mxu0
    %207 = vdwg.mxu0
    %208 = vst.msk [vmem:[#allocation2] sm:$0xff] %vm48, %v202
    %209 = vst.msk [vmem:[#allocation2 + $0x8] sm:$0xff] %vm48, %v205
    // Predicated region
    $region22: #{_ffn_call.1} parent=1 // pred_check
      _
    $region23: #{_ffn_call.1} parent=1 // pred_check_branch
      %211 = sbr.rel (0) target = $region25
    $region24: #{_ffn_call.1} parent=1 // pred_region
      %s213 = ssub.s32 256, 256
      %214 = vsyncadd [#allocation3], %s213
      %s215 = sshll.u32 [#allocation2], 4
      %s216 = int_to_ptr.vmem [resolvable:$true] %s215
      %221 = dma.vmem_to_hbm [thread:$0]  %s216, 256, %s5, [#allocation3], 128, 128, 8
    $region25: #{_ffn_call.1} parent=1 // pred_fallthru
      _
    // Predicated region
    $region26: #{_ffn_call.1} parent=1 // pred_check
      _
    $region27: #{_ffn_call.1} parent=1 // pred_check_branch
      %223 = sbr.rel (0) target = $region29
    $region28: #{_ffn_call.1} parent=1 // pred_region
      %224 = dma.done [#allocation3], 256
    $region29: #{_ffn_call.1} parent=1 // pred_fallthru
      _
    %225 = vsyncpa [#allocation3], 1

</llo_original>
